<compile_context>
chip_gen: v7x
topology: tpu7x:2x2x1
jax: 0.10.0
libtpu: 0.0.40
codegen_flags: <defaults>
</compile_context>

<pallas_src>
import functools

import jax
import jax.numpy as jnp
from jax.experimental import pallas as pl
from jax.experimental.pallas import tpu as pltpu

ALPHA = 0.25
GAMMA = 2.0

_LANE = 128               # lane width (last dim)
_SUB = 8                  # sublane multiple (second-to-last dim)
_MAX_BLOCK_ROWS = 2048    # (2048, 128) f32 = 1 MiB per input per pipeline buffer


def _focal_partial_kernel(x_ref, t_ref, o_ref, *, alpha, gamma):
    """Sums the focal-loss terms of one (block_rows, 128) tile into o_ref[0, 0]."""
    x = x_ref[...].astype(jnp.float32)
    t = t_ref[...].astype(jnp.float32)

    relu_x = jnp.maximum(x, 0.0)
    xt = x * t
    e = jnp.exp(-jnp.abs(x))
    # Numerically-stable BCE with logits (matches torch.nn.BCEWithLogitsLoss):
    #   bce = max(x, 0) - x*t + log1p(exp(-|x|))
    bce = relu_x - xt + jnp.log1p(e)
    # pt = exp(-bce), rewritten to reuse e and avoid the bce -> exp serial chain.
    pt = jnp.exp(xt - relu_x) / (1.0 + e)
    one_minus_pt = 1.0 - pt
    if float(gamma) == 2.0:
        w = one_minus_pt * one_minus_pt        # avoid lax.pow -> exp(g*log(x))
    else:
        w = one_minus_pt ** gamma              # fallback for non-integer gamma
    focal = alpha * w * bce

    # Per-block partial sum: the bulk of the reduction is plain VALU accumulation
    # that co-issues with the loads; only the final cross-lane stage hits the XLU.
    o_ref[0, 0] = jnp.sum(focal)


def focal_loss(inputs, targets, alpha=ALPHA, gamma=GAMMA):
    """Focal loss with mean reduction; elementwise hot path + reduce in Pallas."""
    assert inputs.shape == targets.shape
    n = inputs.size
    assert n > 0

    x = inputs.reshape(-1)
    t = targets.reshape(-1)

    # Block choice: as many full (8,128)-aligned rows as possible, capped so the
    # double-buffered working set stays small on every TPU generation (no
    # vmem_limit_bytes override needed, even on v5e / v7x).
    rows_needed = pl.cdiv(n, _LANE)
    block_rows = min(_MAX_BLOCK_ROWS, pl.cdiv(rows_needed, _SUB) * _SUB)
    block_elems = block_rows * _LANE

    n_padded = pl.cdiv(n, block_elems) * block_elems
    pad = n_padded - n
    if pad:
        # Pad values chosen so each padded element's focal term is exactly 0
        # (see header comment) -> no mask stream and no in-kernel tail masking.
        x = jnp.concatenate([x, jnp.full((pad,), 20.0, x.dtype)])
        t = jnp.concatenate([t, jnp.full((pad,), 1.0, t.dtype)])

    rows = n_padded // _LANE
    x = x.reshape(rows, _LANE)
    t = t.reshape(rows, _LANE)
    num_blocks = rows // block_rows

    kern = functools.partial(
        _focal_partial_kernel, alpha=float(alpha), gamma=float(gamma)
    )
    partials = pl.pallas_call(
        kern,
        out_shape=jax.ShapeDtypeStruct((num_blocks, 1), jnp.float32),
        grid=(num_blocks,),
        in_specs=[
            pl.BlockSpec((block_rows, _LANE), lambda i: (i, 0)),
            pl.BlockSpec((block_rows, _LANE), lambda i: (i, 0)),
        ],
        out_specs=pl.BlockSpec(
            (1, 1), lambda i: (i, 0), memory_space=pltpu.MemorySpace.SMEM
        ),
        compiler_params=pltpu.CompilerParams(
            # Independent per-block partial sums: no cross-step deps, so the grid
            # axis is genuinely parallel (megacore split on v7x, no-op on v5e/v6e).
            dimension_semantics=("parallel",),
        ),
    )(x, t)

    return jnp.sum(partials) / jnp.float32(n)


def _focal_loss_ref(inputs, targets, alpha=ALPHA, gamma=GAMMA):
    x = inputs.astype(jnp.float32)
    t = targets.astype(jnp.float32)
    bce = jnp.maximum(x, 0.0) - x * t + jnp.log1p(jnp.exp(-jnp.abs(x)))
    pt = jnp.exp(-bce)
    return jnp.mean(alpha * (1.0 - pt) ** gamma * bce)


if __name__ == "__main__":
    key = jax.random.PRNGKey(0)

    shapes = [
        (2, 4, 16, 16),    # primary: n = 2048, no padding, single block
        (2, 3, 7, 11),     # ragged n = 462: exercises the zero-contribution padding
        (8, 16, 64, 64),   # n = 524288: multiple blocks on the parallel grid axis
    ]
    for shape in shapes:
        key, k1, k2 = jax.random.split(key, 3)
        logits = jax.random.normal(k1, shape, dtype=jnp.float32)
        targets = jax.random.bernoulli(k2, p=0.3, shape=shape).astype(jnp.float32)

        out = jax.block_until_ready(focal_loss(logits, targets))
        ref = _focal_loss_ref(logits, targets)
        assert jnp.allclose(out, ref, rtol=1e-4, atol=1e-6), (shape, out, ref)

    print("KERNEL_OK")
</pallas_src>

<mosaic_0001>
module attributes {stable_mosaic.version = 11 : i64} {
  func.func @_focal_partial_kernel(%arg0: i32, %arg1: memref<16x128xf32, #tpu.memory_space<vmem>>, %arg2: memref<16x128xf32, #tpu.memory_space<vmem>>, %arg3: memref<1x1xf32, #tpu.memory_space<smem>>) attributes {dimension_semantics = [#tpu.dimension_semantics<parallel>], iteration_bounds = array<i64: 1>, scalar_prefetch = 0 : i64, scratch_operands = 0 : i64, tpu.core_type = #tpu.core_type<tc>, window_params = [{transform_indices = @transform_0, window_bounds = array<i64: 16, 128>}, {transform_indices = @transform_1, window_bounds = array<i64: 16, 128>}, {transform_indices = @transform_2, window_bounds = array<i64: 1, 1>}]} {
    %c0 = arith.constant 0 : index
    %c0_0 = arith.constant 0 : index
    %0 = vector.load %arg1[%c0, %c0_0] : memref<16x128xf32, #tpu.memory_space<vmem>>, vector<16x128xf32>
    %c0_1 = arith.constant 0 : index
    %c0_2 = arith.constant 0 : index
    %1 = vector.load %arg2[%c0_1, %c0_2] : memref<16x128xf32, #tpu.memory_space<vmem>>, vector<16x128xf32>
    %cst = arith.constant 0.000000e+00 : f32
    %2 = vector.broadcast %cst : f32 to vector<16x128xf32>
    %3 = arith.maximumf %0, %2 : vector<16x128xf32>
    %4 = arith.mulf %0, %1 : vector<16x128xf32>
    %5 = math.absf %0 : vector<16x128xf32>
    %cst_3 = arith.constant 0.000000e+00 : f32
    %6 = vector.broadcast %cst_3 : f32 to vector<16x128xf32>
    %7 = arith.subf %6, %5 : vector<16x128xf32>
    %8 = math.exp %7 : vector<16x128xf32>
    %9 = arith.subf %3, %4 : vector<16x128xf32>
    %10 = math.log1p %8 : vector<16x128xf32>
    %11 = arith.addf %9, %10 : vector<16x128xf32>
    %12 = arith.subf %4, %3 : vector<16x128xf32>
    %13 = math.exp %12 : vector<16x128xf32>
    %cst_4 = arith.constant 1.000000e+00 : f32
    %14 = vector.broadcast %cst_4 : f32 to vector<16x128xf32>
    %15 = arith.addf %14, %8 : vector<16x128xf32>
    %16 = arith.divf %13, %15 : vector<16x128xf32>
    %cst_5 = arith.constant 1.000000e+00 : f32
    %17 = vector.broadcast %cst_5 : f32 to vector<16x128xf32>
    %18 = arith.subf %17, %16 : vector<16x128xf32>
    %19 = arith.mulf %18, %18 : vector<16x128xf32>
    %cst_6 = arith.constant 2.500000e-01 : f32
    %20 = vector.broadcast %cst_6 : f32 to vector<16x128xf32>
    %21 = arith.mulf %20, %19 : vector<16x128xf32>
    %22 = arith.mulf %21, %11 : vector<16x128xf32>
    %23 = vector.shape_cast %22 : vector<16x128xf32> to vector<1x16x128xf32>
    %cst_7 = arith.constant dense<0.000000e+00> : vector<1xf32>
    %24 = vector.multi_reduction <add>, %23, %cst_7 [1, 2] : vector<1x16x128xf32> to vector<1xf32>
    %25 = vector.shape_cast %24 : vector<1xf32> to vector<1x1x1xf32>
    %26 = vector.extract %25[0, 0, 0] : f32 from vector<1x1x1xf32>
    %c0_8 = arith.constant 0 : index
    %c0_9 = arith.constant 0 : index
    %27 = memref.load %arg3[%c0_8, %c0_9] : memref<1x1xf32, #tpu.memory_space<smem>>
    memref.store %26, %arg3[%c0_8, %c0_9] : memref<1x1xf32, #tpu.memory_space<smem>>
    return
  }
  func.func @transform_0(%arg0: i32) -> (i32, i32) {
    %c0_i32 = arith.constant 0 : i32
    %c0_i32_0 = arith.constant 0 : i32
    return %arg0, %c0_i32 : i32, i32
  }
  func.func @transform_1(%arg0: i32) -> (i32, i32) {
    %c0_i32 = arith.constant 0 : i32
    %c0_i32_0 = arith.constant 0 : i32
    return %arg0, %c0_i32 : i32, i32
  }
  func.func @transform_2(%arg0: i32) -> (i32, i32) {
    %c0_i32 = arith.constant 0 : i32
    %c0_i32_0 = arith.constant 0 : i32
    return %arg0, %c0_i32 : i32, i32
  }
}

</mosaic_0001>

<llo_original>
// kernel: tpu_custom_call.1
$region0: #{tpu_custom_call.1}
  #allocation0 [shape = 'u32[]', space=smem, size = 0x4, offset = 0x4, fixed_abs, tag = 'smem constant byte address 0x4 - core index']
  #allocation1 [shape = 'u32[144,128]{1,0:T(1,128)}', space=vmem, size = 0x12000, scoped, tag = 'internal scratch']
  %s0 = inlined_call_operand.hbm [shape: f32[16,128], index: 0, kind: input, shape index: {}]
  %s1 = inlined_call_operand.hbm [shape: f32[16,128], index: 1, kind: input, shape index: {}]
  %s2 = inlined_call_operand.hbm [shape: f32[1,1], index: 2, kind: output, shape index: {}]
  %s3 = sld [smem:[#allocation0]]
  $region26: #{tpu_custom_call.1} parent=0
    _
  %s5 = ssub.s32 1, %s3
  %s6 = scalar_select 0, %s5, %s3
  $region1: #{tpu_custom_call.1} parent=0
    #allocation2 [shape = 'u8[8192]{0}', space=vmem, size = 0x2000, scoped, tag = 'input window, operand 0, single buffered']
    #allocation3 [shape = 's32[1]{0}', space=sflag, size = 0x4, scoped, tag = 'scoped memory for tpu_custom_call.1']
    #allocation4 [shape = 's32[1]{0}', space=sflag, size = 0x4, scoped, tag = 'scoped memory for tpu_custom_call.1']
    #allocation5 [shape = 'u8[8192]{0}', space=vmem, size = 0x2000, scoped, tag = 'input window, operand 1, single buffered']
    #allocation6 [shape = 's32[1]{0}', space=sflag, size = 0x4, scoped, tag = 'scoped memory for tpu_custom_call.1']
    #allocation7 [shape = 'u8[512]{0}', space=smem, size = 0x200, scoped, tag = 'output window, operand 0, single buffered']
    %7 = vsyncpa [#allocation3], 0
    %8 = vsyncpa [#allocation6], 0
    %9 = vsyncpa [#allocation4], 0
    // Predicated region
    $region2: #{tpu_custom_call.1} parent=1 // pred_check
      _
    $region3: #{tpu_custom_call.1} parent=1 // pred_check_branch
      %11 = sbr.rel (0) target = $region5
    $region4: #{tpu_custom_call.1} parent=1 // pred_region
      %s13 = ssub.s32 256, 256
      %14 = vsyncadd [#allocation3], %s13
      %s15 = sshll.u32 [#allocation2], 4
      %s16 = int_to_ptr.vmem [resolvable:$true] %s15
      %21 = dma.hbm_to_vmem [thread:$0]  %s0, 256, %s16, [#allocation3], 128, 128, 8
    $region5: #{tpu_custom_call.1} parent=1 // pred_fallthru
      _
    // Predicated region
    $region6: #{tpu_custom_call.1} parent=1 // pred_check
      _
    $region7: #{tpu_custom_call.1} parent=1 // pred_check_branch
      %23 = sbr.rel (0) target = $region9
    $region8: #{tpu_custom_call.1} parent=1 // pred_region
      %s25 = ssub.s32 256, 256
      %26 = vsyncadd [#allocation6], %s25
      %s27 = sshll.u32 [#allocation5], 4
      %s28 = int_to_ptr.vmem [resolvable:$true] %s27
      %33 = dma.hbm_to_vmem [thread:$0]  %s1, 256, %s28, [#allocation6], 128, 128, 8
    $region9: #{tpu_custom_call.1} parent=1 // pred_fallthru
      _
    // Predicated region
    $region10: #{tpu_custom_call.1} parent=1 // pred_check
      _
    $region11: #{tpu_custom_call.1} parent=1 // pred_check_branch
      %35 = sbr.rel (0) target = $region13
    $region12: #{tpu_custom_call.1} parent=1 // pred_region
      %36 = dma.done [#allocation3], 256
    $region13: #{tpu_custom_call.1} parent=1 // pred_fallthru
      _
    // Predicated region
    $region14: #{tpu_custom_call.1} parent=1 // pred_check
      _
    $region15: #{tpu_custom_call.1} parent=1 // pred_check_branch
      %38 = sbr.rel (0) target = $region17
    $region16: #{tpu_custom_call.1} parent=1 // pred_region
      %39 = dma.done [#allocation6], 256
    $region17: #{tpu_custom_call.1} parent=1 // pred_fallthru
      _
    %v40 = vld [vmem:[#allocation2] sm:$0xff]
    %v41 = vld [vmem:[#allocation2 + $0x8] sm:$0xff]
    %v42 = vld [vmem:[#allocation5] sm:$0xff]
    %v43 = vld [vmem:[#allocation5 + $0x8] sm:$0xff]
    %v44 = vmax.f32 %v40, 0.0
    %v45 = vmax.f32 %v41, 0.0
    %v46 = vmul.f32 %v40, %v42
    %v47 = vmul.f32 %v41, %v43
    %v48 = vand.u32 2147483647, %v40
    %v49 = vand.u32 2147483647, %v41
    %v50 = vsub.f32 0.0, %v48
    %v51 = vsub.f32 0.0, %v49
    %v52 = vmul.f32 %v50, 1.442695
    %v53 = vpow.pop %v52
    %v54 = vmul.f32 %v51, 1.442695
    %v55 = vpow.pop %v54
    %v56 = vsub.f32 %v44, %v46
    %v57 = vsub.f32 %v45, %v47
    %v58 = vadd.f32 %v53, 1.0
    %v59 = vlog2.pop %v58
    %v60 = vmul.f32 %v59, 0.6931472
    %v61 = vmul.f32 -0.5, %v53
    %v62 = vadd.f32 %v61, 1.0
    %v63 = vmul.f32 %v62, %v53
    %v64 = vand.u32 2147483647, %v53
    %vm65 = vcmp.lt.f32.partialorder %v64, 0.0004427343
    %v66 = vsel %vm65, %v63, %v60
    %v67 = vadd.f32 %v55, 1.0
    %v68 = vlog2.pop %v67
    %v69 = vmul.f32 %v68, 0.6931472
    %v70 = vmul.f32 -0.5, %v55
    %v71 = vadd.f32 %v70, 1.0
    %v72 = vmul.f32 %v71, %v55
    %v73 = vand.u32 2147483647, %v55
    %vm74 = vcmp.lt.f32.partialorder %v73, 0.0004427343
    %v75 = vsel %vm74, %v72, %v69
    %v76 = vadd.f32 %v56, %v66
    %v77 = vadd.f32 %v57, %v75
    %v78 = vsub.f32 %v46, %v44
    %v79 = vsub.f32 %v47, %v45
    %v80 = vmul.f32 %v78, 1.442695
    %v81 = vpow.pop %v80
    %v82 = vmul.f32 %v79, 1.442695
    %v83 = vpow.pop %v82
    %v84 = vadd.f32 %v53, 1.0
    %v85 = vadd.f32 %v55, 1.0
    %v86 = vrcp.pop %v84
    %v87 = vmul.f32 %v81, %v86
    %v88 = vrcp.pop %v85
    %v89 = vmul.f32 %v83, %v88
    %v90 = vsub.f32 1.0, %v87
    %v91 = vsub.f32 1.0, %v89
    %v92 = vmul.f32 %v90, %v90
    %v93 = vmul.f32 %v91, %v91
    %v94 = vmul.f32 %v92, 0.25
    %v95 = vmul.f32 %v93, 0.25
    %v96 = vmul.f32 %v94, %v76
    %v97 = vmul.f32 %v95, %v77
    %v98 = vadd.f32 %v96, %v97
    %99 = vadd.xlane.f32.xlu0 %v98
    %v100 = vpop.xlane.xlu0 %99
    %v101 = vrot.slane %v100, 4
    %v102 = vadd.f32 %v100, %v101
    %v103 = vrot.slane %v102, 2
    %v104 = vadd.f32 %v102, %v103
    %v105 = vrot.slane %v104, 1
    %v106 = vadd.f32 %v104, %v105
    %s107 = vtos %v106
    %s108 = scalar_lea.smem [#allocation7], 0
    %109 = sst [smem:[%s108]] %s107
    // Predicated region
    $region18: #{tpu_custom_call.1} parent=1 // pred_check
      _
    $region19: #{tpu_custom_call.1} parent=1 // pred_check_branch
      %111 = sbr.rel (0) target = $region21
    $region20: #{tpu_custom_call.1} parent=1 // pred_region
      %s113 = ssub.s32 16, 16
      %114 = vsyncadd [#allocation4], %s113
      %117 = dma.smem_to_hbm [#allocation7], 16, %s2, [#allocation4]
    $region21: #{tpu_custom_call.1} parent=1 // pred_fallthru
      _
    // Predicated region
    $region22: #{tpu_custom_call.1} parent=1 // pred_check
      _
    $region23: #{tpu_custom_call.1} parent=1 // pred_check_branch
      %119 = sbr.rel (0) target = $region25
    $region24: #{tpu_custom_call.1} parent=1 // pred_region
      %120 = dma.done [#allocation4], 16
    $region25: #{tpu_custom_call.1} parent=1 // pred_fallthru
      _
    %121 = sfence
    %122 = vsyncpa [#allocation3], 1
    %123 = vsyncpa [#allocation6], 1
    %124 = vsyncpa [#allocation4], 1

</llo_original>
